<compile_context>
chip_gen: v7x
topology: tpu7x:2x2x1
jax: 0.10.0
libtpu: 0.0.40
codegen_flags: <defaults>
</compile_context>

<pallas_src>
import jax
import jax.numpy as jnp
from jax.experimental import pallas as pl
from jax.experimental.pallas import tpu as pltpu


# ----------------------------- Pallas kernel --------------------------------
def _cdae_kernel(emb_ref, items_ref, w1e_ref, w1i_ref, b1_ref, w2_ref, b2_ref,
                 o_ref, h_ref):
    # emb_ref:   (TB, emb_dim)        user-embedding rows for this batch tile
    # items_ref: (TB, num_items)      item interaction rows for this batch tile
    # w1e_ref:   (emb_dim, H)         fc1 weight, embedding half (torch layout transposed)
    # w1i_ref:   (num_items, H)       fc1 weight, item half
    # b1_ref:    (1, H)
    # w2_ref:    (H, TN)              fc2 weight tile for output tile j
    # b2_ref:    (1, TN)
    # o_ref:     (TB, TN)
    # h_ref:     (TB, H) VMEM scratch: persistent fc1 activations for this batch tile.
    w_dtype = w1e_ref.dtype

    # fc1 is computed once per batch tile (first output tile only) and reused.
    @pl.when(pl.program_id(1) == 0)
    def _():
        h = jnp.dot(emb_ref[...].astype(w_dtype), w1e_ref[...],
                    preferred_element_type=jnp.float32)
        h = h + jnp.dot(items_ref[...].astype(w_dtype), w1i_ref[...],
                        preferred_element_type=jnp.float32)
        h = h + b1_ref[...]
        h_ref[...] = jnp.maximum(h, 0.0)          # activation_to_hidden = relu

    y = jnp.dot(h_ref[...].astype(w2_ref.dtype), w2_ref[...],
                preferred_element_type=jnp.float32)
    y = y + b2_ref[...]
    o_ref[...] = jnp.maximum(y, 0.0)              # activation_from_hidden = relu


# ------------------------------- wrapper -------------------------------------
def _round_up(x, m):
    return (x + m - 1) // m * m


def cdae_forward(item_input_nodes, user_indices, params, *, tb=None, tn=None):
    """Fused CDAE forward.

    item_input_nodes: (B, num_items) f32;  user_indices: (B,) int32.
    """
    emb_table = params["embedding"]
    w1_emb, w1_items = params["w1_emb"], params["w1_items"]
    b1, w2, b2 = params["b1"], params["w2"], params["b2"]

    # Embedding gather stays in JAX (tiny). The torch.cat is eliminated: fc1 is split
    # into its embedding-column and item-column halves, preserving cat ordering.
    user_emb = jnp.take(emb_table, user_indices, axis=0)          # (B, emb_dim)

    B, num_items = item_input_nodes.shape
    emb_dim = user_emb.shape[1]
    H = w1_emb.shape[1]
    d_out = w2.shape[1]

    # ---- tile sizes ----------------------------------------------------------
    # TB: multiple of 8 (sublane); up to 128 for MXU occupancy at large batches.
    if tb is None:
        tb = min(_round_up(B, 8), 128)
    b_pad = _round_up(B, tb)
    # TN: lane-dense multiple of 128 that evenly divides d_out (full d_out otherwise).
    if tn is None:
        if d_out % 128 == 0:
            tn = min(d_out, 512)
            while d_out % tn != 0:       # 512 -> 256 -> 128; 128 always divides here
                tn //= 2
        else:
            tn = d_out

    if b_pad != B:
        pad = b_pad - B
        user_emb = jnp.pad(user_emb, ((0, pad), (0, 0)))
        item_input_nodes = jnp.pad(item_input_nodes, ((0, pad), (0, 0)))

    grid = (b_pad // tb, pl.cdiv(d_out, tn))

    # ---- explicit VMEM budget (double-buffered pipeline + scratch) -----------
    w_itemsize = jnp.dtype(w2.dtype).itemsize
    blk_bytes = (
        (tb * emb_dim + tb * num_items) * 4            # per-batch-tile inputs (f32)
        + (emb_dim * H + num_items * H) * w_itemsize   # fc1 weights (constant index)
        + H * 4                                        # b1
        + H * tn * w_itemsize + tn * 4                 # per-output-tile w2 / b2
        + tb * tn * 4                                  # output tile
    )
    vmem_limit = int(min(max(2 * blk_bytes + tb * H * 4 + (4 << 20), 32 << 20),
                         64 << 20))     # stay within v7x's 64 MiB physical VMEM

    out = pl.pallas_call(
        _cdae_kernel,
        out_shape=jax.ShapeDtypeStruct((b_pad, d_out), jnp.float32),
        grid=grid,
        in_specs=[
            pl.BlockSpec((tb, emb_dim), lambda i, j: (i, 0)),      # user_emb
            pl.BlockSpec((tb, num_items), lambda i, j: (i, 0)),    # item rows
            pl.BlockSpec((emb_dim, H), lambda i, j: (0, 0)),       # w1 (emb half)
            pl.BlockSpec((num_items, H), lambda i, j: (0, 0)),     # w1 (item half)
            pl.BlockSpec((1, H), lambda i, j: (0, 0)),             # b1
            pl.BlockSpec((H, tn), lambda i, j: (0, j)),            # w2 tile
            pl.BlockSpec((1, tn), lambda i, j: (0, j)),            # b2 tile
        ],
        out_specs=pl.BlockSpec((tb, tn), lambda i, j: (i, j)),
        scratch_shapes=[pltpu.VMEM((tb, H), jnp.float32)],         # persistent hidden
        compiler_params=pltpu.CompilerParams(
            dimension_semantics=("parallel", "arbitrary"),
            vmem_limit_bytes=vmem_limit,
        ),
    )(user_emb, item_input_nodes, w1_emb, w1_items, b1, w2, b2)

    return out[:B]


# ----------------------------- parameter init -------------------------------
def init_params(key, num_users, num_items, hidden_neurons, user_embedding_dim,
                dtype=jnp.float32):
    """Deterministic init: xavier_uniform_ for Linear weights, biases = 0.01,
    N(0,1) for the embedding table (nn.Embedding default).

    Weights are stored transposed vs. torch ((in, out)), with fc1 pre-split into its
    embedding-column and item-column halves (matches torch.cat([emb, items]) ordering).
    Pass dtype=jnp.bfloat16 on v6e/v7x to halve fc2 weight bandwidth.
    """
    k_emb, k_w1, k_w2 = jax.random.split(key, 3)
    d_in = num_items + user_embedding_dim

    def xavier_uniform(k, fan_in, fan_out):
        limit = (6.0 / (fan_in + fan_out)) ** 0.5
        return jax.random.uniform(k, (fan_in, fan_out), jnp.float32, -limit, limit)

    w1 = xavier_uniform(k_w1, d_in, hidden_neurons)
    return {
        # NOTE: the reference __init__ sets embedding_dim=hidden_neurons while fc1
        # expects num_items + user_embdedding_dim; consistent only when
        # hidden_neurons == user_embdedding_dim, which we use here.
        "embedding": jax.random.normal(k_emb, (num_users, user_embedding_dim),
                                       jnp.float32),
        "w1_emb": w1[:user_embedding_dim].astype(dtype),
        "w1_items": w1[user_embedding_dim:].astype(dtype),
        "b1": jnp.full((1, hidden_neurons), 0.01, jnp.float32),
        "w2": xavier_uniform(k_w2, hidden_neurons, num_items).astype(dtype),
        "b2": jnp.full((1, num_items), 0.01, jnp.float32),
    }


# ----------------------------------- main ------------------------------------
if __name__ == "__main__":
    # Small shapes consistent with the module; chosen so the grid is (2, 2) and the
    # pl.when / scratch-reuse path is exercised.
    num_users = 16
    num_items = 512
    hidden_neurons = 32
    user_embedding_dim = 32   # must equal hidden_neurons (see NOTE in init_params)
    batch = 16

    key = jax.random.PRNGKey(0)
    k_params, k_items, k_users = jax.random.split(key, 3)

    params = init_params(k_params, num_users, num_items, hidden_neurons,
                         user_embedding_dim)

    # Binary-ish item interaction vectors, like CDAE inputs.
    item_input_nodes = (
        jax.random.uniform(k_items, (batch, num_items)) > 0.8
    ).astype(jnp.float32)
    user_indices = jax.random.randint(k_users, (batch,), 0, num_users,
                                      dtype=jnp.int32)

    out = cdae_forward(item_input_nodes, user_indices, params, tb=8, tn=256)
    out = jax.block_until_ready(out)

    # Pure-JAX reference (split-fc1 form is algebraically identical to cat + fc1).
    user_emb = jnp.take(params["embedding"], user_indices, axis=0)
    h = jnp.maximum(
        user_emb @ params["w1_emb"] + item_input_nodes @ params["w1_items"]
        + params["b1"], 0.0)
    ref = jnp.maximum(h @ params["w2"] + params["b2"], 0.0)

    assert out.shape == (batch, num_items)
    assert jnp.allclose(out, ref, atol=1e-4, rtol=1e-4), float(
        jnp.max(jnp.abs(out - ref)))

    print("KERNEL_OK")
</pallas_src>

<mosaic_0001>
module attributes {stable_mosaic.version = 11 : i64} {
  func.func @_cdae_kernel(%arg0: i32, %arg1: i32, %arg2: memref<8x32xf32, #tpu.memory_space<vmem>>, %arg3: memref<8x512xf32, #tpu.memory_space<vmem>>, %arg4: memref<32x32xf32, #tpu.memory_space<vmem>>, %arg5: memref<512x32xf32, #tpu.memory_space<vmem>>, %arg6: memref<1x32xf32, #tpu.memory_space<vmem>>, %arg7: memref<32x256xf32, #tpu.memory_space<vmem>>, %arg8: memref<1x256xf32, #tpu.memory_space<vmem>>, %arg9: memref<8x256xf32, #tpu.memory_space<vmem>>, %arg10: memref<8x32xf32, #tpu.memory_space<vmem>>) attributes {dimension_semantics = [#tpu.dimension_semantics<parallel>, #tpu.dimension_semantics<arbitrary>], iteration_bounds = array<i64: 2, 2>, scalar_prefetch = 0 : i64, scratch_operands = 1 : i64, tpu.core_type = #tpu.core_type<tc>, window_params = [{transform_indices = @transform_0, window_bounds = array<i64: 8, 32>}, {transform_indices = @transform_1, window_bounds = array<i64: 8, 512>}, {pipeline_mode = #tpu.pipeline_mode<synchronous>, transform_indices = @transform_2, window_bounds = array<i64: 32, 32>}, {pipeline_mode = #tpu.pipeline_mode<synchronous>, transform_indices = @transform_3, window_bounds = array<i64: 512, 32>}, {pipeline_mode = #tpu.pipeline_mode<synchronous>, transform_indices = @transform_4, window_bounds = array<i64: 1, 32>}, {transform_indices = @transform_5, window_bounds = array<i64: 32, 256>}, {transform_indices = @transform_6, window_bounds = array<i64: 1, 256>}, {transform_indices = @transform_7, window_bounds = array<i64: 8, 256>}]} {
    %c0_i32 = arith.constant 0 : i32
    %0 = arith.cmpi eq, %arg1, %c0_i32 : i32
    %1 = arith.extui %0 : i1 to i32
    %c0_i32_0 = arith.constant 0 : i32
    %2 = arith.cmpi ne, %1, %c0_i32_0 : i32
    scf.if %2 {
      %c0_9 = arith.constant 0 : index
      %c0_10 = arith.constant 0 : index
      %12 = vector.load %arg2[%c0_9, %c0_10] : memref<8x32xf32, #tpu.memory_space<vmem>>, vector<8x32xf32>
      %c0_11 = arith.constant 0 : index
      %c0_12 = arith.constant 0 : index
      %13 = vector.load %arg4[%c0_11, %c0_12] : memref<32x32xf32, #tpu.memory_space<vmem>>, vector<32x32xf32>
      %cst_13 = arith.constant dense<0.000000e+00> : vector<8x32xf32>
      %14 = tpu.matmul %12, %13, %cst_13 {dimension_numbers = #tpu.dot_dimension_numbers<[1], [0], [0], [1], [0, 0, 1, 1], [], []>} : vector<8x32xf32>, vector<32x32xf32>, vector<8x32xf32> -> vector<8x32xf32>
      %c0_14 = arith.constant 0 : index
      %c0_15 = arith.constant 0 : index
      %15 = vector.load %arg3[%c0_14, %c0_15] : memref<8x512xf32, #tpu.memory_space<vmem>>, vector<8x512xf32>
      %c0_16 = arith.constant 0 : index
      %c0_17 = arith.constant 0 : index
      %16 = vector.load %arg5[%c0_16, %c0_17] : memref<512x32xf32, #tpu.memory_space<vmem>>, vector<512x32xf32>
      %cst_18 = arith.constant dense<0.000000e+00> : vector<8x32xf32>
      %17 = tpu.matmul %15, %16, %cst_18 {dimension_numbers = #tpu.dot_dimension_numbers<[1], [0], [0], [1], [0, 0, 1, 1], [], []>} : vector<8x512xf32>, vector<512x32xf32>, vector<8x32xf32> -> vector<8x32xf32>
      %18 = arith.addf %14, %17 : vector<8x32xf32>
      %c0_19 = arith.constant 0 : index
      %c0_20 = arith.constant 0 : index
      %19 = vector.load %arg6[%c0_19, %c0_20] : memref<1x32xf32, #tpu.memory_space<vmem>>, vector<1x32xf32>
      %20 = vector.broadcast %19 : vector<1x32xf32> to vector<8x32xf32>
      %21 = arith.addf %18, %20 : vector<8x32xf32>
      %cst_21 = arith.constant 0.000000e+00 : f32
      %22 = vector.broadcast %cst_21 : f32 to vector<8x32xf32>
      %23 = arith.maximumf %21, %22 : vector<8x32xf32>
      %c0_22 = arith.constant 0 : index
      %c0_23 = arith.constant 0 : index
      %24 = vector.load %arg10[%c0_22, %c0_23] : memref<8x32xf32, #tpu.memory_space<vmem>>, vector<8x32xf32>
      tpu.vector_store %arg10[%c0_22, %c0_23], %23 {strides = array<i32>} : memref<8x32xf32, #tpu.memory_space<vmem>>, vector<8x32xf32>,
    } else {
    }
    %c0 = arith.constant 0 : index
    %c0_1 = arith.constant 0 : index
    %3 = vector.load %arg10[%c0, %c0_1] : memref<8x32xf32, #tpu.memory_space<vmem>>, vector<8x32xf32>
    %c0_2 = arith.constant 0 : index
    %c0_3 = arith.constant 0 : index
    %4 = vector.load %arg7[%c0_2, %c0_3] : memref<32x256xf32, #tpu.memory_space<vmem>>, vector<32x256xf32>
    %cst = arith.constant dense<0.000000e+00> : vector<8x256xf32>
    %5 = tpu.matmul %3, %4, %cst {dimension_numbers = #tpu.dot_dimension_numbers<[1], [0], [0], [1], [0, 0, 1, 1], [], []>} : vector<8x32xf32>, vector<32x256xf32>, vector<8x256xf32> -> vector<8x256xf32>
    %c0_4 = arith.constant 0 : index
    %c0_5 = arith.constant 0 : index
    %6 = vector.load %arg8[%c0_4, %c0_5] : memref<1x256xf32, #tpu.memory_space<vmem>>, vector<1x256xf32>
    %7 = vector.broadcast %6 : vector<1x256xf32> to vector<8x256xf32>
    %8 = arith.addf %5, %7 : vector<8x256xf32>
    %cst_6 = arith.constant 0.000000e+00 : f32
    %9 = vector.broadcast %cst_6 : f32 to vector<8x256xf32>
    %10 = arith.maximumf %8, %9 : vector<8x256xf32>
    %c0_7 = arith.constant 0 : index
    %c0_8 = arith.constant 0 : index
    %11 = vector.load %arg9[%c0_7, %c0_8] : memref<8x256xf32, #tpu.memory_space<vmem>>, vector<8x256xf32>
    tpu.vector_store %arg9[%c0_7, %c0_8], %10 {strides = array<i32>} : memref<8x256xf32, #tpu.memory_space<vmem>>, vector<8x256xf32>,
    return
  }
  func.func @transform_0(%arg0: i32, %arg1: i32) -> (i32, i32) {
    %c0_i32 = arith.constant 0 : i32
    %c0_i32_0 = arith.constant 0 : i32
    return %arg0, %c0_i32 : i32, i32
  }
  func.func @transform_1(%arg0: i32, %arg1: i32) -> (i32, i32) {
    %c0_i32 = arith.constant 0 : i32
    %c0_i32_0 = arith.constant 0 : i32
    return %arg0, %c0_i32 : i32, i32
  }
  func.func @transform_2(%arg0: i32, %arg1: i32) -> (i32, i32) {
    %c0_i32 = arith.constant 0 : i32
    %c0_i32_0 = arith.constant 0 : i32
    %c0_i32_1 = arith.constant 0 : i32
    return %c0_i32, %c0_i32_0 : i32, i32
  }
  func.func @transform_3(%arg0: i32, %arg1: i32) -> (i32, i32) {
    %c0_i32 = arith.constant 0 : i32
    %c0_i32_0 = arith.constant 0 : i32
    %c0_i32_1 = arith.constant 0 : i32
    return %c0_i32, %c0_i32_0 : i32, i32
  }
  func.func @transform_4(%arg0: i32, %arg1: i32) -> (i32, i32) {
    %c0_i32 = arith.constant 0 : i32
    %c0_i32_0 = arith.constant 0 : i32
    %c0_i32_1 = arith.constant 0 : i32
    return %c0_i32, %c0_i32_0 : i32, i32
  }
  func.func @transform_5(%arg0: i32, %arg1: i32) -> (i32, i32) {
    %c0_i32 = arith.constant 0 : i32
    %c0_i32_0 = arith.constant 0 : i32
    return %c0_i32, %arg1 : i32, i32
  }
  func.func @transform_6(%arg0: i32, %arg1: i32) -> (i32, i32) {
    %c0_i32 = arith.constant 0 : i32
    %c0_i32_0 = arith.constant 0 : i32
    return %c0_i32, %arg1 : i32, i32
  }
  func.func @transform_7(%arg0: i32, %arg1: i32) -> (i32, i32) {
    %c0_i32 = arith.constant 0 : i32
    return %arg0, %arg1 : i32, i32
  }
}

</mosaic_0001>

<llo_original>
// kernel: tpu_custom_call.1
$region0: #{tpu_custom_call.1}
  #allocation0 [shape = 'u32[]', space=smem, size = 0x4, offset = 0x4, fixed_abs, tag = 'smem constant byte address 0x4 - core index']
  #allocation1 [shape = 'u32[144,128]{1,0:T(1,128)}', space=vmem, size = 0x12000, scoped, tag = 'internal scratch']
  #allocation2 [shape = 'f32[8,32]{1,0:T(8,128)}', space=vmem, size = 0x1000, scoped, tag = 'scratch operand']
  %s0 = inlined_call_operand.vmem [shape: f32[16,32], index: 0, kind: input, shape index: {}]
  %s1 = inlined_call_operand.vmem [shape: f32[16,512], index: 1, kind: input, shape index: {}]
  %s2 = inlined_call_operand.vmem [shape: f32[32,32], index: 2, kind: input, shape index: {}]
  %s3 = inlined_call_operand.vmem [shape: f32[512,32], index: 3, kind: input, shape index: {}]
  %s4 = inlined_call_operand.vmem [shape: f32[1,32], index: 4, kind: input, shape index: {}]
  %s5 = inlined_call_operand.vmem [shape: f32[32,512], index: 5, kind: input, shape index: {}]
  %s6 = inlined_call_operand.vmem [shape: f32[1,512], index: 6, kind: input, shape index: {}]
  %s7 = inlined_call_operand.hbm [shape: f32[16,512], index: 7, kind: output, shape index: {}]
  %s8 = sld [smem:[#allocation0]]
  $region88: #{tpu_custom_call.1} parent=0
    _
  %s10 = ssub.s32 1, %s8
  %s11 = scalar_select 0, %s10, %s8
  $region1: #{tpu_custom_call.1} parent=0
    #allocation3 [shape = 'u8[65536]{0}', space=vmem, size = 0x10000, scoped, tag = 'input window, operand 5']
    #allocation4 [shape = 'u8[16384]{0}', space=vmem, size = 0x4000, scoped, tag = 'output window, operand 0']
    #allocation5 [shape = 's32[2]{0}', space=sflag, size = 0x8, scoped, tag = 'scoped memory for tpu_custom_call.1']
    %12 = vsyncpa [#allocation5], 0
    %s13 = scalar_lea.sflag [#allocation5], 1
    %14 = vsyncpa %s13, 0
    loop: start=0, step=1, limit=6
    $region2: #{tpu_custom_call.1} parent=1 // loop_pre_header
      _
    $region3: #{tpu_custom_call.1} parent=1 // loop_header
      %s16 = sphi 0, %s20
      %p17 = scmp.ge.s32.totalorder %s16, 6
      %s23 = sphi 0, %s35
      %s24 = sphi 0, %s31
      %s25 = sphi 0, %s23
      %s26 = sphi 0, %s24
      %s27 = sphi 0, %s25
      %s28 = sphi 0, %s26
      %s38 = sphi 0, %s40
      %s41 = sphi 0, %s38
      %s42 = sphi 0, %s41
      %s58 = sphi 0, %s42
      %s64 = sphi 0, %s66
      %s67 = sphi 0, %s64
      %s68 = sphi 0, %s67
      %s84 = sphi 0, %s68
      %s88 = sphi 0, %s88
      %s90 = sphi 0, %s88
      %s91 = sphi 0, %s90
      %s105 = sphi 0, %s91
      %s109 = sphi 0, %s109
      %s111 = sphi 0, %s109
      %s112 = sphi 0, %s111
      %s126 = sphi 0, %s112
      %s130 = sphi 0, %s130
      %s132 = sphi 0, %s130
      %s133 = sphi 0, %s132
      %s147 = sphi 0, %s133
      %s153 = sphi 0, %s155
      %s156 = sphi 0, %s153
      %s157 = sphi 0, %s156
      %s173 = sphi 0, %s157
      %s179 = sphi 0, %s181
      %s182 = sphi 0, %s179
      %s183 = sphi 0, %s182
      %s199 = sphi 0, %s183
      %s207 = sphi 0, %s209
      %s210 = sphi 0, %s207
      %s211 = sphi 0, %s210
      %s227 = sphi 0, %s211
    $region4: #{tpu_custom_call.1} parent=1 // loop_header_branch
      %19 = sbr.rel (%p17) target = $region8
    $region5: #{tpu_custom_call.1} parent=1 // loop_body
      %s21 = ssub.s32 %s16, 1
      %s22 = ssub.s32 %s16, 2
      %s29 = sadd.s32 1, %s24
      %p30 = scmp.ge.s32.totalorder %s29, 2
      %s31 = scalar_select %p30, 0, %s29
      %s32 = sadd.s32 1, %s23
      %s33 = scalar_select %p30, %s32, %s23
      %p34 = scmp.ge.s32.totalorder %s33, 2
      %s35 = scalar_select %p34, 0, %s33
      %s36 = ssub.s32 %s23, %s35
      %p37 = scmp.eq.s32.totalorder %s36, 0
      %s39 = sadd.s32 %s38, 1
      %s40 = scalar_select %p37, %s38, %s39
      %p43 = pneg %p37
      %p44 = scmp.eq.s32.totalorder %s16, 3
      %p45 = por %p43, %p44
      %p46 = scmp.ne.s32.totalorder %s38, %s41
      %p47 = scmp.eq.s32.totalorder %s16, 0
      %p48 = por %p46, %p47
      %p49 = scmp.ne.s32.totalorder %s38, %s41
      %p50 = scmp.eq.s32.totalorder %s21, 3
      %p51 = por %p49, %p50
      %p52 = scmp.ne.s32.totalorder %s41, %s42
      %p53 = scmp.eq.s32.totalorder %s21, 0
      %p54 = por %p52, %p53
      %p55 = scmp.ne.s32.totalorder %s41, %s42
      %p56 = scmp.eq.s32.totalorder %s22, 3
      %p57 = por %p55, %p56
      %p59 = scmp.ne.s32.totalorder %s42, %s58
      %p60 = scmp.eq.s32.totalorder %s22, 0
      %p61 = por %p59, %p60
      %s62 = ssub.s32 %s23, %s35
      %p63 = scmp.eq.s32.totalorder %s62, 0
      %s65 = sadd.s32 %s64, 1
      %s66 = scalar_select %p63, %s64, %s65
      %p69 = pneg %p63
      %p70 = scmp.eq.s32.totalorder %s16, 3
      %p71 = por %p69, %p70
      %p72 = scmp.ne.s32.totalorder %s64, %s67
      %p73 = scmp.eq.s32.totalorder %s16, 0
      %p74 = por %p72, %p73
      %p75 = scmp.ne.s32.totalorder %s64, %s67
      %p76 = scmp.eq.s32.totalorder %s21, 3
      %p77 = por %p75, %p76
      %p78 = scmp.ne.s32.totalorder %s67, %s68
      %p79 = scmp.eq.s32.totalorder %s21, 0
      %p80 = por %p78, %p79
      %p81 = scmp.ne.s32.totalorder %s67, %s68
      %p82 = scmp.eq.s32.totalorder %s22, 3
      %p83 = por %p81, %p82
      %p85 = scmp.ne.s32.totalorder %s68, %s84
      %p86 = scmp.eq.s32.totalorder %s22, 0
      %p87 = por %p85, %p86
      %s89 = sadd.s32 %s88, 1
      %p92 = scmp.eq.s32.totalorder %s16, 3
      %p93 = scmp.ne.s32.totalorder %s88, %s90
      %p94 = scmp.eq.s32.totalorder %s16, 0
      %p95 = por %p93, %p94
      %p96 = scmp.ne.s32.totalorder %s88, %s90
      %p97 = scmp.eq.s32.totalorder %s21, 3
      %p98 = por %p96, %p97
      %p99 = scmp.ne.s32.totalorder %s90, %s91
      %p100 = scmp.eq.s32.totalorder %s21, 0
      %p101 = por %p99, %p100
      %p102 = scmp.ne.s32.totalorder %s90, %s91
      %p103 = scmp.eq.s32.totalorder %s22, 3
      %p104 = por %p102, %p103
      %p106 = scmp.ne.s32.totalorder %s91, %s105
      %p107 = scmp.eq.s32.totalorder %s22, 0
      %p108 = por %p106, %p107
      %s110 = sadd.s32 %s109, 1
      %p113 = scmp.eq.s32.totalorder %s16, 3
      %p114 = scmp.ne.s32.totalorder %s109, %s111
      %p115 = scmp.eq.s32.totalorder %s16, 0
      %p116 = por %p114, %p115
      %p117 = scmp.ne.s32.totalorder %s109, %s111
      %p118 = scmp.eq.s32.totalorder %s21, 3
      %p119 = por %p117, %p118
      %p120 = scmp.ne.s32.totalorder %s111, %s112
      %p121 = scmp.eq.s32.totalorder %s21, 0
      %p122 = por %p120, %p121
      %p123 = scmp.ne.s32.totalorder %s111, %s112
      %p124 = scmp.eq.s32.totalorder %s22, 3
      %p125 = por %p123, %p124
      %p127 = scmp.ne.s32.totalorder %s112, %s126
      %p128 = scmp.eq.s32.totalorder %s22, 0
      %p129 = por %p127, %p128
      %s131 = sadd.s32 %s130, 1
      %p134 = scmp.eq.s32.totalorder %s16, 3
      %p135 = scmp.ne.s32.totalorder %s130, %s132
      %p136 = scmp.eq.s32.totalorder %s16, 0
      %p137 = por %p135, %p136
      %p138 = scmp.ne.s32.totalorder %s130, %s132
      %p139 = scmp.eq.s32.totalorder %s21, 3
      %p140 = por %p138, %p139
      %p141 = scmp.ne.s32.totalorder %s132, %s133
      %p142 = scmp.eq.s32.totalorder %s21, 0
      %p143 = por %p141, %p142
      %p144 = scmp.ne.s32.totalorder %s132, %s133
      %p145 = scmp.eq.s32.totalorder %s22, 3
      %p146 = por %p144, %p145
      %p148 = scmp.ne.s32.totalorder %s133, %s147
      %p149 = scmp.eq.s32.totalorder %s22, 0
      %p150 = por %p148, %p149
      %s151 = ssub.s32 %s24, %s31
      %p152 = scmp.eq.s32.totalorder %s151, 0
      %s154 = sadd.s32 %s153, 1
      %s155 = scalar_select %p152, %s153, %s154
      %p158 = pneg %p152
      %p159 = scmp.eq.s32.totalorder %s16, 3
      %p160 = por %p158, %p159
      %p161 = scmp.ne.s32.totalorder %s153, %s156
      %p162 = scmp.eq.s32.totalorder %s16, 0
      %p163 = por %p161, %p162
      %p164 = scmp.ne.s32.totalorder %s153, %s156
      %p165 = scmp.eq.s32.totalorder %s21, 3
      %p166 = por %p164, %p165
      %p167 = scmp.ne.s32.totalorder %s156, %s157
      %p168 = scmp.eq.s32.totalorder %s21, 0
      %p169 = por %p167, %p168
      %p170 = scmp.ne.s32.totalorder %s156, %s157
      %p171 = scmp.eq.s32.totalorder %s22, 3
      %p172 = por %p170, %p171
      %p174 = scmp.ne.s32.totalorder %s157, %s173
      %p175 = scmp.eq.s32.totalorder %s22, 0
      %p176 = por %p174, %p175
      %s177 = ssub.s32 %s24, %s31
      %p178 = scmp.eq.s32.totalorder %s177, 0
      %s180 = sadd.s32 %s179, 1
      %s181 = scalar_select %p178, %s179, %s180
      %p184 = pneg %p178
      %p185 = scmp.eq.s32.totalorder %s16, 3
      %p186 = por %p184, %p185
      %p187 = scmp.ne.s32.totalorder %s179, %s182
      %p188 = scmp.eq.s32.totalorder %s16, 0
      %p189 = por %p187, %p188
      %p190 = scmp.ne.s32.totalorder %s179, %s182
      %p191 = scmp.eq.s32.totalorder %s21, 3
      %p192 = por %p190, %p191
      %p193 = scmp.ne.s32.totalorder %s182, %s183
      %p194 = scmp.eq.s32.totalorder %s21, 0
      %p195 = por %p193, %p194
      %p196 = scmp.ne.s32.totalorder %s182, %s183
      %p197 = scmp.eq.s32.totalorder %s22, 3
      %p198 = por %p196, %p197
      %p200 = scmp.ne.s32.totalorder %s183, %s199
      %p201 = scmp.eq.s32.totalorder %s22, 0
      %p202 = por %p200, %p201
      %s203 = ssub.s32 %s23, %s35
      %s204 = ssub.s32 %s24, %s31
      %s205 = sor.u32 %s203, %s204
      %p206 = scmp.eq.s32.totalorder %s205, 0
      %s208 = sadd.s32 %s207, 1
      %s209 = scalar_select %p206, %s207, %s208
      %p212 = pneg %p206
      %p213 = scmp.eq.s32.totalorder %s16, 3
      %p214 = por %p212, %p213
      %p215 = scmp.ne.s32.totalorder %s207, %s210
      %p216 = scmp.eq.s32.totalorder %s16, 0
      %p217 = por %p215, %p216
      %p218 = scmp.ne.s32.totalorder %s207, %s210
      %p219 = scmp.eq.s32.totalorder %s21, 3
      %p220 = por %p218, %p219
      %p221 = scmp.ne.s32.totalorder %s210, %s211
      %p222 = scmp.eq.s32.totalorder %s21, 0
      %p223 = por %p221, %p222
      %p224 = scmp.ne.s32.totalorder %s210, %s211
      %p225 = scmp.eq.s32.totalorder %s22, 3
      %p226 = por %p224, %p225
      %p228 = scmp.ne.s32.totalorder %s211, %s227
      %p229 = scmp.eq.s32.totalorder %s22, 0
      %p230 = por %p228, %p229
      %p231 = scmp.le.s32.totalorder 1, %s16
      %p232 = scmp.lt.s32.totalorder %s16, 5
      %p233 = pnand %p231, %p232
      %p234 = pneg %p233
      // Predicated region
      $region9: #{tpu_custom_call.1} parent=5 // pred_check
        _
      $region10: #{tpu_custom_call.1} parent=5 // pred_check_branch
        %236 = sbr.rel (%p233) target = $region12
      $region11: #{tpu_custom_call.1} parent=5 // pred_region
        %s237 = ssub.s32 %s16, 1
        // Predicated region
        $region13: #{tpu_custom_call.1} parent=11 // pred_check
          %p238 = pneg %p101
        $region14: #{tpu_custom_call.1} parent=11 // pred_check_branch
          %240 = sbr.rel (%p238) target = $region16
        $region15: #{tpu_custom_call.1} parent=11 // pred_region
          _
        $region16: #{tpu_custom_call.1} parent=11 // pred_fallthru
          _
        // Predicated region
        $region17: #{tpu_custom_call.1} parent=11 // pred_check
          %p241 = pneg %p122
        $region18: #{tpu_custom_call.1} parent=11 // pred_check_branch
          %243 = sbr.rel (%p241) target = $region20
        $region19: #{tpu_custom_call.1} parent=11 // pred_region
          _
        $region20: #{tpu_custom_call.1} parent=11 // pred_fallthru
          _
        // Predicated region
        $region21: #{tpu_custom_call.1} parent=11 // pred_check
          %p244 = pneg %p143
        $region22: #{tpu_custom_call.1} parent=11 // pred_check_branch
          %246 = sbr.rel (%p244) target = $region24
        $region23: #{tpu_custom_call.1} parent=11 // pred_region
          _
        $region24: #{tpu_custom_call.1} parent=11 // pred_fallthru
          _
      $region12: #{tpu_custom_call.1} parent=5 // pred_fallthru
        _
      %p247 = scmp.lt.s32.totalorder %s16, 4
      // Predicated region
      $region25: #{tpu_custom_call.1} parent=5 // pred_check
        %p248 = pneg %p247
      $region26: #{tpu_custom_call.1} parent=5 // pred_check_branch
        %250 = sbr.rel (%p248) target = $region28
      $region27: #{tpu_custom_call.1} parent=5 // pred_region
        // Predicated region
        $region29: #{tpu_custom_call.1} parent=27 // pred_check
          %p251 = pneg %p48
        $region30: #{tpu_custom_call.1} parent=27 // pred_check_branch
          %253 = sbr.rel (%p251) target = $region32
        $region31: #{tpu_custom_call.1} parent=27 // pred_region
          %p254 = scmp.lt.s32.totalorder %s23, 1
          %s255 = scalar_select %p254, %s23, 1
          %s256 = smul.addr %s255, 8
          %s257 = scalar_lea.vmem %s0, %s256
        $region32: #{tpu_custom_call.1} parent=27 // pred_fallthru
          _
        // Predicated region
        $region33: #{tpu_custom_call.1} parent=27 // pred_check
          %p258 = pneg %p74
        $region34: #{tpu_custom_call.1} parent=27 // pred_check_branch
          %260 = sbr.rel (%p258) target = $region36
        $region35: #{tpu_custom_call.1} parent=27 // pred_region
          %p261 = scmp.lt.s32.totalorder %s23, 1
          %s262 = scalar_select %p261, %s23, 1
          %s263 = smul.addr %s262, 4
          %s264 = smul.addr %s263, 8
          %s265 = scalar_lea.vmem %s1, %s264
        $region36: #{tpu_custom_call.1} parent=27 // pred_fallthru
          _
        // Predicated region
        $region37: #{tpu_custom_call.1} parent=27 // pred_check
          %p266 = pneg %p163
        $region38: #{tpu_custom_call.1} parent=27 // pred_check_branch
          %268 = sbr.rel (%p266) target = $region40
        $region39: #{tpu_custom_call.1} parent=27 // pred_region
          %s269 = sand.u32 %s153, 1
          %s270 = sand.u32 %s153, 1
          %s271 = smul.addr %s270, 64
          %s272 = scalar_lea.vmem [#allocation3], %s271
          %s273 = smul.u32 2, %s24
          %s274 = smul.addr %s273, 8
          %s275 = scalar_lea.vmem %s5, %s274
          // Predicated region
          $region41: #{tpu_custom_call.1} parent=39 // pred_check
            _
          $region42: #{tpu_custom_call.1} parent=39 // pred_check_branch
            %277 = sbr.rel (0) target = $region44
          $region43: #{tpu_custom_call.1} parent=39 // pred_region
            // Predicated region
            $region45: #{tpu_custom_call.1} parent=43 // pred_check
              _
            $region46: #{tpu_custom_call.1} parent=43 // pred_check_branch
              %279 = sbr.rel (0) target = $region48
            $region47: #{tpu_custom_call.1} parent=43 // pred_region
              loop: start=0, step=1, limit=1
              $region49: #{tpu_custom_call.1} parent=47 // loop_pre_header
                _
              $region50: #{tpu_custom_call.1} parent=47 // loop_header
                %s281 = sphi 0, %s285
                %p282 = scmp.ge.s32.totalorder %s281, 1
                %s286 = sphi %s275, %s275
                %s287 = sphi %s272, %s272
              $region51: #{tpu_custom_call.1} parent=47 // loop_header_branch
                %284 = sbr.rel (%p282) target = $region55
              $region52: #{tpu_custom_call.1} parent=47 // loop_body
                %v288 = vld [vmem:[%s286] sm:$0xff]
                %289 = vst [vmem:[%s287] sm:$0xff] %v288
                %v290 = vld [vmem:[%s286 + $0x8] sm:$0xff]
                %291 = vst [vmem:[%s287 + $0x8] sm:$0xff] %v290
                %v292 = vld [vmem:[%s286 + $0x20] sm:$0xff]
                %293 = vst [vmem:[%s287 + $0x10] sm:$0xff] %v292
                %v294 = vld [vmem:[%s286 + $0x28] sm:$0xff]
                %295 = vst [vmem:[%s287 + $0x18] sm:$0xff] %v294
                %v296 = vld [vmem:[%s286 + $0x40] sm:$0xff]
                %297 = vst [vmem:[%s287 + $0x20] sm:$0xff] %v296
                %v298 = vld [vmem:[%s286 + $0x48] sm:$0xff]
                %299 = vst [vmem:[%s287 + $0x28] sm:$0xff] %v298
                %v300 = vld [vmem:[%s286 + $0x60] sm:$0xff]
                %301 = vst [vmem:[%s287 + $0x30] sm:$0xff] %v300
                %v302 = vld [vmem:[%s286 + $0x68] sm:$0xff]
                %303 = vst [vmem:[%s287 + $0x38] sm:$0xff] %v302
              $region53: #{tpu_custom_call.1} parent=47 // loop_footer
                %s285 = sadd.s32 1, %s281
              $region54: #{tpu_custom_call.1} parent=47 // loop_footer_branch
                %280 = sbr.rel target = $region50
              $region55: #{tpu_custom_call.1} parent=47 // loop_exit
                _
            $region48: #{tpu_custom_call.1} parent=43 // pred_fallthru
              _
            // Predicated region
            $region56: #{tpu_custom_call.1} parent=43 // pred_check
              _
            $region57: #{tpu_custom_call.1} parent=43 // pred_check_branch
              %305 = sbr.rel target = $region59
            $region58: #{tpu_custom_call.1} parent=43 // pred_region
              _
            $region59: #{tpu_custom_call.1} parent=43 // pred_fallthru
              _
          $region44: #{tpu_custom_call.1} parent=39 // pred_fallthru
            _
          %306 = vnop
        $region40: #{tpu_custom_call.1} parent=27 // pred_fallthru
          _
        // Predicated region
        $region60: #{tpu_custom_call.1} parent=27 // pred_check
          %p307 = pneg %p189
        $region61: #{tpu_custom_call.1} parent=27 // pred_check_branch
          %309 = sbr.rel (%p307) target = $region63
        $region62: #{tpu_custom_call.1} parent=27 // pred_region
          %s310 = smul.u32 2, %s24
          %p311 = scmp.lt.s32.totalorder %s310, 3
          %s312 = scalar_select %p311, %s310, 3
          %s313 = scalar_lea.vmem %s6, %s312
          %s314 = smul.u32 2, %s24
        $region63: #{tpu_custom_call.1} parent=27 // pred_fallthru
          _
      $region28: #{tpu_custom_call.1} parent=5 // pred_fallthru
        _
      %p315 = scmp.le.s32.totalorder 1, %s16
      %p316 = scmp.lt.s32.totalorder %s16, 5
      %p317 = pnand %p315, %p316
      %p318 = pneg %p317
      // Predicated region
      $region64: #{tpu_custom_call.1} parent=5 // pred_check
        _
      $region65: #{tpu_custom_call.1} parent=5 // pred_check_branch
        %320 = sbr.rel (%p317) target = $region67
      $region66: #{tpu_custom_call.1} parent=5 // pred_region
        %s321 = ssub.s32 %s16, 1
        %s322 = sand.u32 %s156, 1
        %s323 = sand.u32 %s156, 1
        %s324 = smul.addr %s323, 64
        %s325 = scalar_lea.vmem [#allocation3], %s324
        // Predicated region
        $region68: #{tpu_custom_call.1} parent=66 // pred_check
          %p326 = pneg %p169
        $region69: #{tpu_custom_call.1} parent=66 // pred_check_branch
          %328 = sbr.rel (%p326) target = $region71
        $region70: #{tpu_custom_call.1} parent=66 // pred_region
          _
        $region71: #{tpu_custom_call.1} parent=66 // pred_fallthru
          _
        %p329 = scmp.lt.s32.totalorder %s25, 1
        %s330 = scalar_select %p329, %s25, 1
        %s331 = smul.addr %s330, 8
        %s332 = scalar_lea.vmem %s0, %s331
        %p333 = pneg %p54
        %p334 = pneg %p51
        %p335 = scmp.lt.s32.totalorder %s25, 1
        %s336 = scalar_select %p335, %s25, 1
        %s337 = smul.addr %s336, 4
        %s338 = smul.addr %s337, 8
        %s339 = scalar_lea.vmem %s1, %s338
        %p340 = pneg %p80
        %p341 = pneg %p77
        %p342 = pneg %p101
        %p343 = pneg %p98
        %p344 = pneg %p122
        %p345 = pneg %p119
        %p346 = pneg %p143
        %p347 = pneg %p140
        %s348 = sand.u32 %s156, 1
        %s349 = sand.u32 %s156, 1
        %s350 = smul.addr %s349, 64
        %s351 = scalar_lea.vmem [#allocation3], %s350
        %p352 = pneg %p169
        %p353 = pneg %p166
        %s354 = smul.u32 2, %s26
        %p355 = scmp.lt.s32.totalorder %s354, 3
        %s356 = scalar_select %p355, %s354, 3
        %s357 = scalar_lea.vmem %s6, %s356
        %p358 = pneg %p195
        %p359 = pneg %p192
        %p360 = pneg %p223
        %p361 = pneg %p220
        %s362 = sand.u32 %s210, 1
        %s363 = scalar_lea.sflag [#allocation5], %s362
        %s364 = sand.u32 %s210, 1
        %s365 = smul.addr %s364, 16
        %s366 = scalar_lea.vmem [#allocation4], %s365
        %p367 = scmp.lt.s32.totalorder %s25, 1
        %s368 = scalar_select %p367, %s25, 1
        %s369 = smul.addr %s368, 8
        %s370 = scalar_lea.vmem %s0, %s369
        %p371 = scmp.lt.s32.totalorder %s25, 1
        %s372 = scalar_select %p371, %s25, 1
        %s373 = smul.addr %s372, 4
        %s374 = smul.addr %s373, 8
        %s375 = scalar_lea.vmem %s1, %s374
        %s376 = smul.u32 2, %s26
        %s377 = smul.u32 2, %s26
        %p378 = scmp.lt.s32.totalorder %s377, 3
        %s379 = scalar_select %p378, %s377, 3
        %s380 = scalar_lea.vmem %s6, %s379
        %s381 = smul.u32 2, %s26
        %s382 = smul.u32 2, %s26
        %p383 = scmp.eq.s32.totalorder %s26, 0
        // Predicated region
        $region72: #{tpu_custom_call.1} parent=66 // pred_check
          %p384 = pneg %p383
        $region73: #{tpu_custom_call.1} parent=66 // pred_check_branch
          %386 = sbr.rel (%p384) target = $region75
        $region74: #{tpu_custom_call.1} parent=66 // pred_region
          %v387 = vld [vmem:[%s370] sm:$0xff]
          %v388 = vld [vmem:[%s2] sm:$0xff]
          %v389 = vld [vmem:[%s2 + $0x8] sm:$0xff]
          %v390 = vld [vmem:[%s2 + $0x10] sm:$0xff]
          %v391 = vld [vmem:[%s2 + $0x18] sm:$0xff]
          %v392 = vld [vmem:[%s375] sm:$0xff]
          %v393 = vld [vmem:[%s375 + $0x8] sm:$0xff]
          %v394 = vld [vmem:[%s375 + $0x10] sm:$0xff]
          %v395 = vld [vmem:[%s375 + $0x18] sm:$0xff]
          %v396 = vld [vmem:[%s3] sm:$0xff]
          %v397 = vld [vmem:[%s3 + $0x8] sm:$0xff]
          %v398 = vld [vmem:[%s3 + $0x10] sm:$0xff]
          %v399 = vld [vmem:[%s3 + $0x18] sm:$0xff]
          %v400 = vld [vmem:[%s3 + $0x20] sm:$0xff]
          %v401 = vld [vmem:[%s3 + $0x28] sm:$0xff]
          %v402 = vld [vmem:[%s3 + $0x30] sm:$0xff]
          %v403 = vld [vmem:[%s3 + $0x38] sm:$0xff]
          %v404 = vld [vmem:[%s3 + $0x40] sm:$0xff]
          %v405 = vld [vmem:[%s3 + $0x48] sm:$0xff]
          %v406 = vld [vmem:[%s3 + $0x50] sm:$0xff]
          %v407 = vld [vmem:[%s3 + $0x58] sm:$0xff]
          %v408 = vld [vmem:[%s3 + $0x60] sm:$0xff]
          %v409 = vld [vmem:[%s3 + $0x68] sm:$0xff]
          %v410 = vld [vmem:[%s3 + $0x70] sm:$0xff]
          %v411 = vld [vmem:[%s3 + $0x78] sm:$0xff]
          %v412 = vld [vmem:[%s3 + $0x80] sm:$0xff]
          %v413 = vld [vmem:[%s3 + $0x88] sm:$0xff]
          %v414 = vld [vmem:[%s3 + $0x90] sm:$0xff]
          %v415 = vld [vmem:[%s3 + $0x98] sm:$0xff]
          %v416 = vld [vmem:[%s3 + $0xa0] sm:$0xff]
          %v417 = vld [vmem:[%s3 + $0xa8] sm:$0xff]
          %v418 = vld [vmem:[%s3 + $0xb0] sm:$0xff]
          %v419 = vld [vmem:[%s3 + $0xb8] sm:$0xff]
          %v420 = vld [vmem:[%s3 + $0xc0] sm:$0xff]
          %v421 = vld [vmem:[%s3 + $0xc8] sm:$0xff]
          %v422 = vld [vmem:[%s3 + $0xd0] sm:$0xff]
          %v423 = vld [vmem:[%s3 + $0xd8] sm:$0xff]
          %v424 = vld [vmem:[%s3 + $0xe0] sm:$0xff]
          %v425 = vld [vmem:[%s3 + $0xe8] sm:$0xff]
          %v426 = vld [vmem:[%s3 + $0xf0] sm:$0xff]
          %v427 = vld [vmem:[%s3 + $0xf8] sm:$0xff]
          %v428 = vld [vmem:[%s3 + $0x100] sm:$0xff]
          %v429 = vld [vmem:[%s3 + $0x108] sm:$0xff]
          %v430 = vld [vmem:[%s3 + $0x110] sm:$0xff]
          %v431 = vld [vmem:[%s3 + $0x118] sm:$0xff]
          %v432 = vld [vmem:[%s3 + $0x120] sm:$0xff]
          %v433 = vld [vmem:[%s3 + $0x128] sm:$0xff]
          %v434 = vld [vmem:[%s3 + $0x130] sm:$0xff]
          %v435 = vld [vmem:[%s3 + $0x138] sm:$0xff]
          %v436 = vld [vmem:[%s3 + $0x140] sm:$0xff]
          %v437 = vld [vmem:[%s3 + $0x148] sm:$0xff]
          %v438 = vld [vmem:[%s3 + $0x150] sm:$0xff]
          %v439 = vld [vmem:[%s3 + $0x158] sm:$0xff]
          %v440 = vld [vmem:[%s3 + $0x160] sm:$0xff]
          %v441 = vld [vmem:[%s3 + $0x168] sm:$0xff]
          %v442 = vld [vmem:[%s3 + $0x170] sm:$0xff]
          %v443 = vld [vmem:[%s3 + $0x178] sm:$0xff]
          %v444 = vld [vmem:[%s3 + $0x180] sm:$0xff]
          %v445 = vld [vmem:[%s3 + $0x188] sm:$0xff]
          %v446 = vld [vmem:[%s3 + $0x190] sm:$0xff]
          %v447 = vld [vmem:[%s3 + $0x198] sm:$0xff]
          %v448 = vld [vmem:[%s3 + $0x1a0] sm:$0xff]
          %v449 = vld [vmem:[%s3 + $0x1a8] sm:$0xff]
          %v450 = vld [vmem:[%s3 + $0x1b0] sm:$0xff]
          %v451 = vld [vmem:[%s3 + $0x1b8] sm:$0xff]
          %v452 = vld [vmem:[%s3 + $0x1c0] sm:$0xff]
          %v453 = vld [vmem:[%s3 + $0x1c8] sm:$0xff]
          %v454 = vld [vmem:[%s3 + $0x1d0] sm:$0xff]
          %v455 = vld [vmem:[%s3 + $0x1d8] sm:$0xff]
          %v456 = vld [vmem:[%s3 + $0x1e0] sm:$0xff]
          %v457 = vld [vmem:[%s3 + $0x1e8] sm:$0xff]
          %v458 = vld [vmem:[%s3 + $0x1f0] sm:$0xff]
          %v459 = vld [vmem:[%s3 + $0x1f8] sm:$0xff]
          %460 = vmatprep.subr.mxu0 0.0
          %461 = vmatpush1.msra.mxu0 %v396
          %462 = vmatprep.subr.mxu0 0.0
          %463 = vmatpush1.msra.mxu0 %v397
          %464 = vmatprep.subr.mxu0 0.0
          %465 = vmatpush1.msra.mxu0 %v398
          %466 = vmatprep.subr.mxu0 0.0
          %467 = vmatpush1.msra.mxu0 %v399
          %468 = vmatprep.subr.mxu0 0.0
          %469 = vmatpush1.msra.mxu0 %v400
          %470 = vmatprep.subr.mxu0 0.0
          %471 = vmatpush1.msra.mxu0 %v401
          %472 = vmatprep.subr.mxu0 0.0
          %473 = vmatpush1.msra.mxu0 %v402
          %474 = vmatprep.subr.mxu0 0.0
          %475 = vmatpush1.msra.mxu0 %v403
          %476 = vmatprep.subr.mxu0 0.0
          %477 = vmatpush1.msra.mxu0 %v404
          %478 = vmatprep.subr.mxu0 0.0
          %479 = vmatpush1.msra.mxu0 %v405
          %480 = vmatprep.subr.mxu0 0.0
          %481 = vmatpush1.msra.mxu0 %v406
          %482 = vmatprep.subr.mxu0 0.0
          %483 = vmatpush1.msra.mxu0 %v407
          %484 = vmatprep.subr.mxu0 0.0
          %485 = vmatpush1.msra.mxu0 %v408
          %486 = vmatprep.subr.mxu0 0.0
          %487 = vmatpush1.msra.mxu0 %v409
          %488 = vmatprep.subr.mxu0 0.0
          %489 = vmatpush1.msra.mxu0 %v410
          %490 = vmatprep.subr.mxu0 0.0
          %491 = vmatpush1.msra.mxu0 %v411
          %492 = vmatprep.subr.mxu0 0.0
          %493 = vmatpush1.msra.mxu0 %v412
          %494 = vmatprep.subr.mxu0 0.0
          %495 = vmatpush1.msra.mxu0 %v413
          %496 = vmatprep.subr.mxu0 0.0
          %497 = vmatpush1.msra.mxu0 %v414
          %498 = vmatprep.subr.mxu0 0.0
          %499 = vmatpush1.msra.mxu0 %v415
          %500 = vmatprep.subr.mxu0 0.0
          %501 = vmatpush1.msra.mxu0 %v416
          %502 = vmatprep.subr.mxu0 0.0
          %503 = vmatpush1.msra.mxu0 %v417
          %504 = vmatprep.subr.mxu0 0.0
          %505 = vmatpush1.msra.mxu0 %v418
          %506 = vmatprep.subr.mxu0 0.0
          %507 = vmatpush1.msra.mxu0 %v419
          %508 = vmatprep.subr.mxu0 0.0
          %509 = vmatpush1.msra.mxu0 %v420
          %510 = vmatprep.subr.mxu0 0.0
          %511 = vmatpush1.msra.mxu0 %v421
          %512 = vmatprep.subr.mxu0 0.0
          %513 = vmatpush1.msra.mxu0 %v422
          %514 = vmatprep.subr.mxu0 0.0
          %515 = vmatpush1.msra.mxu0 %v423
          %516 = vmatprep.subr.mxu0 0.0
          %517 = vmatpush1.msra.mxu0 %v424
          %518 = vmatprep.subr.mxu0 0.0
          %519 = vmatpush1.msra.mxu0 %v425
          %520 = vmatprep.subr.mxu0 0.0
          %521 = vmatpush1.msra.mxu0 %v426
          %522 = vmatprep.subr.mxu0 0.0
          %523 = vmatpush1.msra.mxu0 %v427
          %524 = vmatprep.mubr.f32.mxu0 %v393
          %525 = vmatmul.mubr.f32.gmra.mrb[0].mxu0 %v392
          %v526 = vpop.f32.mrb[0].mxu0
          %v527 = vadd.f32 0.0, %v526
          %v528 = vpop.f32.mrb[0].mxu0
          %529 = vdwg.mxu0
          %530 = vmatprep.subr.mxu0 0.0
          %531 = vmatpush1.msra.mxu0 %v428
          %532 = vmatprep.subr.mxu0 0.0
          %533 = vmatpush1.msra.mxu0 %v429
          %534 = vmatprep.subr.mxu0 0.0
          %535 = vmatpush1.msra.mxu0 %v430
          %536 = vmatprep.subr.mxu0 0.0
          %537 = vmatpush1.msra.mxu0 %v431
          %538 = vmatprep.subr.mxu0 0.0
          %539 = vmatpush1.msra.mxu0 %v432
          %540 = vmatprep.subr.mxu0 0.0
          %541 = vmatpush1.msra.mxu0 %v433
          %542 = vmatprep.subr.mxu0 0.0
          %543 = vmatpush1.msra.mxu0 %v434
          %544 = vmatprep.subr.mxu0 0.0
          %545 = vmatpush1.msra.mxu0 %v435
          %546 = vmatprep.subr.mxu0 0.0
          %547 = vmatpush1.msra.mxu0 %v436
          %548 = vmatprep.subr.mxu0 0.0
          %549 = vmatpush1.msra.mxu0 %v437
          %550 = vmatprep.subr.mxu0 0.0
          %551 = vmatpush1.msra.mxu0 %v438
          %552 = vmatprep.subr.mxu0 0.0
          %553 = vmatpush1.msra.mxu0 %v439
          %554 = vmatprep.subr.mxu0 0.0
          %555 = vmatpush1.msra.mxu0 %v440
          %556 = vmatprep.subr.mxu0 0.0
          %557 = vmatpush1.msra.mxu0 %v441
          %558 = vmatprep.subr.mxu0 0.0
          %559 = vmatpush1.msra.mxu0 %v442
          %560 = vmatprep.subr.mxu0 0.0
          %561 = vmatpush1.msra.mxu0 %v443
          %562 = vmatprep.subr.mxu0 0.0
          %563 = vmatpush1.msra.mxu0 %v444
          %564 = vmatprep.subr.mxu0 0.0
          %565 = vmatpush1.msra.mxu0 %v445
          %566 = vmatprep.subr.mxu0 0.0
          %567 = vmatpush1.msra.mxu0 %v446
          %568 = vmatprep.subr.mxu0 0.0
          %569 = vmatpush1.msra.mxu0 %v447
          %570 = vmatprep.subr.mxu0 0.0
          %571 = vmatpush1.msra.mxu0 %v448
          %572 = vmatprep.subr.mxu0 0.0
          %573 = vmatpush1.msra.mxu0 %v449
          %574 = vmatprep.subr.mxu0 0.0
          %575 = vmatpush1.msra.mxu0 %v450
          %576 = vmatprep.subr.mxu0 0.0
          %577 = vmatpush1.msra.mxu0 %v451
          %578 = vmatprep.subr.mxu0 0.0
          %579 = vmatpush1.msra.mxu0 %v452
          %580 = vmatprep.subr.mxu0 0.0
          %581 = vmatpush1.msra.mxu0 %v453
          %582 = vmatprep.subr.mxu0 0.0
          %583 = vmatpush1.msra.mxu0 %v454
          %584 = vmatprep.subr.mxu0 0.0
          %585 = vmatpush1.msra.mxu0 %v455
          %586 = vmatprep.subr.mxu0 0.0
          %587 = vmatpush1.msra.mxu0 %v456
          %588 = vmatprep.subr.mxu0 0.0
          %589 = vmatpush1.msra.mxu0 %v457
          %590 = vmatprep.subr.mxu0 0.0
          %591 = vmatpush1.msra.mxu0 %v458
          %592 = vmatprep.subr.mxu0 0.0
          %593 = vmatpush1.msra.mxu0 %v459
          %594 = vmatprep.mubr.f32.mxu0 %v395
          %595 = vmatmul.mubr.f32.gmra.mrb[0].mxu0 %v394
          %v596 = vpop.f32.mrb[0].mxu0
          %v597 = vadd.f32 %v527, %v596
          %v598 = vpop.f32.mrb[0].mxu0
          %599 = vdwg.mxu0
          %vm600 = vcmask 261120
          %v602 = vsel %vm600, %v387, 0
          %604 = vmatprep.subr.mxu0 0.0
          %605 = vmatpush1.msra.mxu0 %v388
          %606 = vmatprep.subr.mxu0 0.0
          %607 = vmatpush1.msra.mxu0 %v389
          %608 = vmatprep.subr.mxu0 0.0
          %609 = vmatpush1.msra.mxu0 %v390
          %610 = vmatprep.subr.mxu0 0.0
          %611 = vmatpush1.msra.mxu0 %v391
          %612 = vmatprep.subr.mxu0 0.0
          %613 = vmatpush1.msra.mxu0 0.0
          %614 = vmatprep.subr.mxu0 0.0
          %615 = vmatpush1.msra.mxu0 0.0
          %616 = vmatprep.subr.mxu0 0.0
          %617 = vmatpush1.msra.mxu0 0.0
          %618 = vmatprep.subr.mxu0 0.0
          %619 = vmatpush1.msra.mxu0 0.0
          %620 = vmatprep.subr.mxu0 0.0
          %621 = vmatpush1.msra.mxu0 0.0
          %622 = vmatprep.subr.mxu0 0.0
          %623 = vmatpush1.msra.mxu0 0.0
          %624 = vmatprep.subr.mxu0 0.0
          %625 = vmatpush1.msra.mxu0 0.0
          %626 = vmatprep.subr.mxu0 0.0
          %627 = vmatpush1.msra.mxu0 0.0
          %628 = vmatprep.subr.mxu0 0.0
          %629 = vmatpush1.msra.mxu0 0.0
          %630 = vmatprep.subr.mxu0 0.0
          %631 = vmatpush1.msra.mxu0 0.0
          %632 = vmatprep.subr.mxu0 0.0
          %633 = vmatpush1.msra.mxu0 0.0
          %634 = vmatprep.subr.mxu0 0.0
          %635 = vmatpush1.msra.mxu0 0.0
          %636 = vmatprep.subr.mxu0 0.0
          %637 = vmatpush1.msra.mxu0 0.0
          %638 = vmatprep.subr.mxu0 0.0
          %639 = vmatpush1.msra.mxu0 0.0
          %640 = vmatprep.subr.mxu0 0.0
          %641 = vmatpush1.msra.mxu0 0.0
          %642 = vmatprep.subr.mxu0 0.0
          %643 = vmatpush1.msra.mxu0 0.0
          %644 = vmatprep.subr.mxu0 0.0
          %645 = vmatpush1.msra.mxu0 0.0
          %646 = vmatprep.subr.mxu0 0.0
          %647 = vmatpush1.msra.mxu0 0.0
          %648 = vmatprep.subr.mxu0 0.0
          %649 = vmatpush1.msra.mxu0 0.0
          %650 = vmatprep.subr.mxu0 0.0
          %651 = vmatpush1.msra.mxu0 0.0
          %652 = vmatprep.subr.mxu0 0.0
          %653 = vmatpush1.msra.mxu0 0.0
          %654 = vmatprep.subr.mxu0 0.0
          %655 = vmatpush1.msra.mxu0 0.0
          %656 = vmatprep.subr.mxu0 0.0
          %657 = vmatpush1.msra.mxu0 0.0
          %658 = vmatprep.subr.mxu0 0.0
          %659 = vmatpush1.msra.mxu0 0.0
          %660 = vmatprep.subr.mxu0 0.0
          %661 = vmatpush1.msra.mxu0 0.0
          %662 = vmatprep.subr.mxu0 0.0
          %663 = vmatpush1.msra.mxu0 0.0
          %664 = vmatprep.subr.mxu0 0.0
          %665 = vmatpush1.msra.mxu0 0.0
          %666 = vmatprep.subr.mxu0 0.0
          %667 = vmatpush1.msra.mxu0 0.0
          %668 = vmatprep.mubr.f32.mxu0 0.0
          %669 = vmatmul.mubr.f32.gmra.mrb[0].mxu0 %v602
          %v670 = vpop.f32.mrb[0].mxu0
          %v671 = vadd.f32 %v597, %v670
          %v672 = vpop.f32.mrb[0].mxu0
          %673 = vdwg.mxu0
          %v674 = vld [vmem:[%s4] sm:$0x1]
          %v676 = vlaneseq
          %v677 = vshrl.u32 %v676, 7
          %v678 = vsub.s32 0, %v677
          %v679 = vrot.slane %v674, %v678
          %v681 = vadd.f32 %v671, %v679
          %v682 = vmax.f32 %v681, 0.0
          %683 = vst.msk [vmem:[#allocation2] sm:$0xff] %vm600, %v682
        $region75: #{tpu_custom_call.1} parent=66 // pred_fallthru
          _
        %v684 = vld [vmem:[#allocation2] sm:$0xff]
        %v685 = vld [vmem:[%s325] sm:$0xff]
        %v686 = vld [vmem:[%s325 + $0x8] sm:$0xff]
        %v687 = vld [vmem:[%s325 + $0x10] sm:$0xff]
        %v688 = vld [vmem:[%s325 + $0x18] sm:$0xff]
        %v689 = vld [vmem:[%s325 + $0x20] sm:$0xff]
        %v690 = vld [vmem:[%s325 + $0x28] sm:$0xff]
        %v691 = vld [vmem:[%s325 + $0x30] sm:$0xff]
        %v692 = vld [vmem:[%s325 + $0x38] sm:$0xff]
        %v693 = vld [vmem:[%s380] sm:$0x3]
        %v695 = vlaneseq
        %v696 = vshrl.u32 %v695, 7
        %v697 = vsub.s32 0, %v696
        %v698 = vrot.slane %v693, %v697
        %v699 = vlaneseq
        %v700 = vshrl.u32 %v699, 7
        %v701 = vsub.s32 1, %v700
        %v702 = vrot.slane %v693, %v701
        %vm705 = vcmask 261120
        %v707 = vsel %vm705, %v684, 0
        %709 = vmatprep.subr.mxu0 %v686
        %710 = vmatpush1.msra.mxu0 %v685
        %711 = vmatprep.subr.mxu0 %v688
        %712 = vmatpush1.msra.mxu0 %v687
        %713 = vmatprep.subr.mxu0 %v690
        %714 = vmatpush1.msra.mxu0 %v689
        %715 = vmatprep.subr.mxu0 %v692
        %716 = vmatpush1.msra.mxu0 %v691
        %717 = vmatprep.subr.mxu0 0.0
        %718 = vmatpush1.msra.mxu0 0.0
        %719 = vmatprep.subr.mxu0 0.0
        %720 = vmatpush1.msra.mxu0 0.0
        %721 = vmatprep.subr.mxu0 0.0
        %722 = vmatpush1.msra.mxu0 0.0
        %723 = vmatprep.subr.mxu0 0.0
        %724 = vmatpush1.msra.mxu0 0.0
        %725 = vmatprep.subr.mxu0 0.0
        %726 = vmatpush1.msra.mxu0 0.0
        %727 = vmatprep.subr.mxu0 0.0
        %728 = vmatpush1.msra.mxu0 0.0
        %729 = vmatprep.subr.mxu0 0.0
        %730 = vmatpush1.msra.mxu0 0.0
        %731 = vmatprep.subr.mxu0 0.0
        %732 = vmatpush1.msra.mxu0 0.0
        %733 = vmatprep.subr.mxu0 0.0
        %734 = vmatpush1.msra.mxu0 0.0
        %735 = vmatprep.subr.mxu0 0.0
        %736 = vmatpush1.msra.mxu0 0.0
        %737 = vmatprep.subr.mxu0 0.0
        %738 = vmatpush1.msra.mxu0 0.0
        %739 = vmatprep.subr.mxu0 0.0
        %740 = vmatpush1.msra.mxu0 0.0
        %741 = vmatprep.subr.mxu0 0.0
        %742 = vmatpush1.msra.mxu0 0.0
        %743 = vmatprep.subr.mxu0 0.0
        %744 = vmatpush1.msra.mxu0 0.0
        %745 = vmatprep.subr.mxu0 0.0
        %746 = vmatpush1.msra.mxu0 0.0
        %747 = vmatprep.subr.mxu0 0.0
        %748 = vmatpush1.msra.mxu0 0.0
        %749 = vmatprep.subr.mxu0 0.0
        %750 = vmatpush1.msra.mxu0 0.0
        %751 = vmatprep.subr.mxu0 0.0
        %752 = vmatpush1.msra.mxu0 0.0
        %753 = vmatprep.subr.mxu0 0.0
        %754 = vmatpush1.msra.mxu0 0.0
        %755 = vmatprep.subr.mxu0 0.0
        %756 = vmatpush1.msra.mxu0 0.0
        %757 = vmatprep.subr.mxu0 0.0
        %758 = vmatpush1.msra.mxu0 0.0
        %759 = vmatprep.subr.mxu0 0.0
        %760 = vmatpush1.msra.mxu0 0.0
        %761 = vmatprep.subr.mxu0 0.0
        %762 = vmatpush1.msra.mxu0 0.0
        %763 = vmatprep.subr.mxu0 0.0
        %764 = vmatpush1.msra.mxu0 0.0
        %765 = vmatprep.subr.mxu0 0.0
        %766 = vmatpush1.msra.mxu0 0.0
        %767 = vmatprep.subr.mxu0 0.0
        %768 = vmatpush1.msra.mxu0 0.0
        %769 = vmatprep.subr.mxu0 0.0
        %770 = vmatpush1.msra.mxu0 0.0
        %771 = vmatprep.subr.mxu0 0.0
        %772 = vmatpush1.msra.mxu0 0.0
        %773 = vmatprep.mubr.f32.mxu0 0.0
        %774 = vmatmul.mubr.f32.gmra.mrb[0].mxu0 %v707
        %v775 = vpop.f32.mrb[0].mxu0
        %v776 = vadd.f32 %v698, %v775
        %v777 = vpop.f32.mrb[0].mxu0
        %v778 = vadd.f32 %v702, %v777
        %779 = vdwg.mxu0
        %v780 = vmax.f32 %v776, 0.0
        %v781 = vmax.f32 %v778, 0.0
        %782 = vst [vmem:[%s366] sm:$0xff] %v780
        %783 = vst [vmem:[%s366 + $0x8] sm:$0xff] %v781
        %s784 = sand.u32 %s210, 1
        %s785 = scalar_lea.sflag [#allocation5], %s784
        %s786 = sand.u32 %s210, 1
        %s787 = smul.addr %s786, 16
        %s788 = scalar_lea.vmem [#allocation4], %s787
        // Predicated region
        $region76: #{tpu_custom_call.1} parent=66 // pred_check
          %p789 = pneg %p220
        $region77: #{tpu_custom_call.1} parent=66 // pred_check_branch
          %791 = sbr.rel (%p789) target = $region79
        $region78: #{tpu_custom_call.1} parent=66 // pred_region
          %s792 = smul.u32 2, %s26
          %s794 = ssub.s32 256, 256
          %795 = vsyncadd %s785, %s794
          %s796 = smul.addr %s25, 4
          %s797 = sadd.s32 %s792, %s796
          %s798 = smul.addr %s797, 128
          %s799 = scalar_lea.hbm %s7, %s798
          %s801 = sshll.u32 %s788, 4
          %s802 = int_to_ptr.vmem [resolvable:$true] %s801
          %804 = dma.vmem_to_hbm [thread:$0]  %s802, 256, %s799, %s785
        $region79: #{tpu_custom_call.1} parent=66 // pred_fallthru
          _
      $region67: #{tpu_custom_call.1} parent=5 // pred_fallthru
        _
      %p805 = scmp.le.s32.totalorder 2, %s16
      // Predicated region
      $region80: #{tpu_custom_call.1} parent=5 // pred_check
        %p806 = pneg %p805
      $region81: #{tpu_custom_call.1} parent=5 // pred_check_branch
        %808 = sbr.rel (%p806) target = $region83
      $region82: #{tpu_custom_call.1} parent=5 // pred_region
        %s809 = ssub.s32 %s16, 2
        // Predicated region
        $region84: #{tpu_custom_call.1} parent=82 // pred_check
          %p810 = pneg %p226
        $region85: #{tpu_custom_call.1} parent=82 // pred_check_branch
          %812 = sbr.rel (%p810) target = $region87
        $region86: #{tpu_custom_call.1} parent=82 // pred_region
          %s813 = sand.u32 %s211, 1
          %s814 = scalar_lea.sflag [#allocation5], %s813
          %s815 = sand.u32 %s211, 1
          %s816 = smul.addr %s815, 16
          %s817 = scalar_lea.vmem [#allocation4], %s816
          %818 = dma.done %s814, 256
        $region87: #{tpu_custom_call.1} parent=82 // pred_fallthru
          _
      $region83: #{tpu_custom_call.1} parent=5 // pred_fallthru
        _
    $region6: #{tpu_custom_call.1} parent=1 // loop_footer
      %s20 = sadd.s32 1, %s16
    $region7: #{tpu_custom_call.1} parent=1 // loop_footer_branch
      %15 = sbr.rel target = $region3
    $region8: #{tpu_custom_call.1} parent=1 // loop_exit
      _
    %819 = vsyncpa [#allocation5], 1
    %s820 = scalar_lea.sflag [#allocation5], 1
    %821 = vsyncpa %s820, 1

</llo_original>
